<compile_context>
chip_gen: v5e
topology: v5e:2x2
jax: 0.10.0
libtpu: 0.0.40
codegen_flags: <defaults>
</compile_context>

<pallas_src>
import functools

import jax
import jax.numpy as jnp
from jax.experimental import pallas as pl
from jax.experimental.pallas import tpu as pltpu

_SUBLANE = 8
_TM_CAP = 1024                 # review: >=1024-row batch tiles (amortize ~0.35us/step)
_SMALL_BATCH = 16              # below this, splitting the grid buys nothing
_BUFFERED1_THRESHOLD = 8 << 20  # single-buffer resident params once they are big
_VMEM_SOFT_LIMIT = 100 << 20


def _round_up(x, m):
    return ((x + m - 1) // m) * m


def _fused_mlp_kernel(*refs, num_layers):
    """Fused forward: h = x; for each layer h = relu?(h @ W_i + b_i)."""
    x_ref = refs[0]
    w_refs = refs[1:1 + num_layers]
    b_refs = refs[1 + num_layers:1 + 2 * num_layers]
    o_ref = refs[1 + 2 * num_layers]

    h = x_ref[...]
    for i in range(num_layers):
        # MXU matmul with f32 accumulation.  (Add precision=HIGHEST here and in
        # the reference if strict f32 parity is needed at larger K.)
        h = jnp.dot(h, w_refs[i][...], preferred_element_type=jnp.float32)
        h = h + b_refs[i][...]          # (1, out) broadcasts over rows
        if i != num_layers - 1:
            h = jnp.maximum(h, 0.0)     # ReLU on all but the last layer
    o_ref[...] = h.astype(o_ref.dtype)


def init_mlp_params(key, input_dim, output_dim, hidden_dim, num_layers):
    """Deterministic init mirroring nn.Linear's U(-1/sqrt(fan_in), 1/sqrt(fan_in)).

    Stored PyTorch-style as (out_features, in_features)."""
    dims = [input_dim] + [hidden_dim] * (num_layers - 1) + [output_dim]
    params = []
    for i in range(len(dims) - 1):
        fan_in, fan_out = dims[i], dims[i + 1]
        key, kw, kb = jax.random.split(key, 3)
        bound = 1.0 / jnp.sqrt(fan_in)
        w = jax.random.uniform(kw, (fan_out, fan_in), jnp.float32, -bound, bound)
        b = jax.random.uniform(kb, (fan_out,), jnp.float32, -bound, bound)
        params.append((w, b))
    return params


def prepare_pallas_params(params):
    """One-time prep: transpose each weight to (in_features, out_features).

    No lane padding: intermediate activations live only in VMEM/vregs, so
    128-lane-padding tiny hidden dims buys nothing and inflates MXU pushes and
    weight VMEM; the final logits are written at natural width so the kernel's
    HBM writeback is exactly B * output_dim * 4 bytes.
    """
    return [(w.T, b.reshape(1, -1)) for (w, b) in params]


def mlp_classifier_forward(prepared_params, x):
    """Fused MLP forward. x: (B, input_dim). Returns (B, output_dim)."""
    B, in_dim = x.shape
    n = len(prepared_params)
    out_dim = prepared_params[-1][0].shape[1]

    # --- batch-tile policy ---------------------------------------------------
    #  * tiles as large as possible (per-grid-step overhead dominates at these
    #    layer sizes), capped at _TM_CAP rows;
    #  * once the batch is big enough to split, keep >= 2 grid steps so the
    #    "parallel" batch axis can use both TensorCores on v7x;
    #  * no jnp.pad: grid = cdiv(B, tm) and Pallas masks the ragged last tile's
    #    stores; rows are independent, so out-of-bounds tail reads are inert.
    if B <= _SMALL_BATCH:
        tm = B                                       # one full-extent tile
    else:
        tm = min(_TM_CAP, _round_up(pl.cdiv(B, 2), _SUBLANE))
    grid = (pl.cdiv(B, tm),)

    x_spec = pl.BlockSpec((tm, in_dim), lambda i: (i, 0))

    # Weights / biases: whole-array VMEM-resident blocks with a constant index
    # map.  They are never re-fetched across grid steps, so once they are large
    # enough to matter, request single-buffering (halves resident footprint).
    total_param_bytes = sum(
        w.size * w.dtype.itemsize + b.size * b.dtype.itemsize
        for w, b in prepared_params)
    param_kwargs = {}
    if total_param_bytes > _BUFFERED1_THRESHOLD:
        param_kwargs = dict(pipeline_mode=pl.Buffered(1))
    w_specs = [pl.BlockSpec(w.shape, lambda i: (0, 0), **param_kwargs)
               for w, _ in prepared_params]
    b_specs = [pl.BlockSpec(b.shape, lambda i: (0, 0), **param_kwargs)
               for _, b in prepared_params]

    compiler_kwargs = dict(dimension_semantics=("parallel",))
    # VMEM budget guard for the weights-resident design (matters on v7x's 64 MiB
    # VMEM / 32 MiB scoped default; a no-op at small shapes).
    est_vmem = (2 * total_param_bytes
                + 4 * tm * (in_dim + out_dim) * x.dtype.itemsize)
    if est_vmem > (24 << 20):
        compiler_kwargs["vmem_limit_bytes"] = int(min(2 * est_vmem, _VMEM_SOFT_LIMIT))
    # TODO(synk): for hidden dims where 2 * sum(weight bytes) approaches the
    # ~48-56 MiB v7x budget, fall back to a per-layer streamed / K-tiled grid
    # instead of keeping every layer's weights resident.

    flat_args = ([x]
                 + [w for w, _ in prepared_params]
                 + [b for _, b in prepared_params])

    kernel = functools.partial(_fused_mlp_kernel, num_layers=n)
    out = pl.pallas_call(
        kernel,
        out_shape=jax.ShapeDtypeStruct((B, out_dim), x.dtype),
        grid=grid,
        in_specs=[x_spec] + w_specs + b_specs,
        out_specs=pl.BlockSpec((tm, out_dim), lambda i: (i, 0)),
        compiler_params=pltpu.CompilerParams(**compiler_kwargs),
    )(*flat_args)
    return out


def mlp_reference(params, x):
    """Pure-JAX reference matching the PyTorch module (weights stored (out, in))."""
    h = x
    n = len(params)
    for i, (w, b) in enumerate(params):
        h = h @ w.T + b
        if i != n - 1:
            h = jnp.maximum(h, 0.0)
    return h


if __name__ == "__main__":
    # Small shapes consistent with the module's forward:
    batch, input_dim, hidden_dim, output_dim, num_layers = 8, 32, 32, 10, 3

    key = jax.random.PRNGKey(0)
    key, kx = jax.random.split(key)
    x = jax.random.normal(kx, (batch, input_dim), jnp.float32)

    params = init_mlp_params(key, input_dim, output_dim, hidden_dim, num_layers)
    prepared = prepare_pallas_params(params)   # transpose ONCE, not per forward

    fwd = jax.jit(mlp_classifier_forward)
    out = jax.block_until_ready(fwd(prepared, x))

    ref = mlp_reference(params, x)
    assert out.shape == (batch, output_dim)
    assert jnp.allclose(out, ref, atol=1e-5, rtol=1e-5), \
        float(jnp.max(jnp.abs(out - ref)))

    print("KERNEL_OK")
</pallas_src>

<mosaic_0001>
module attributes {stable_mosaic.version = 11 : i64} {
  func.func @_fused_mlp_kernel(%arg0: i32, %arg1: memref<8x32xf32, #tpu.memory_space<vmem>>, %arg2: memref<32x32xf32, #tpu.memory_space<vmem>>, %arg3: memref<32x32xf32, #tpu.memory_space<vmem>>, %arg4: memref<32x10xf32, #tpu.memory_space<vmem>>, %arg5: memref<1x32xf32, #tpu.memory_space<vmem>>, %arg6: memref<1x32xf32, #tpu.memory_space<vmem>>, %arg7: memref<1x10xf32, #tpu.memory_space<vmem>>, %arg8: memref<8x10xf32, #tpu.memory_space<vmem>>) attributes {dimension_semantics = [#tpu.dimension_semantics<parallel>], iteration_bounds = array<i64: 1>, scalar_prefetch = 0 : i64, scratch_operands = 0 : i64, tpu.core_type = #tpu.core_type<tc>, window_params = [{transform_indices = @transform_0, window_bounds = array<i64: 8, 32>}, {pipeline_mode = #tpu.pipeline_mode<synchronous>, transform_indices = @transform_1, window_bounds = array<i64: 32, 32>}, {pipeline_mode = #tpu.pipeline_mode<synchronous>, transform_indices = @transform_2, window_bounds = array<i64: 32, 32>}, {pipeline_mode = #tpu.pipeline_mode<synchronous>, transform_indices = @transform_3, window_bounds = array<i64: 32, 10>}, {pipeline_mode = #tpu.pipeline_mode<synchronous>, transform_indices = @transform_4, window_bounds = array<i64: 1, 32>}, {pipeline_mode = #tpu.pipeline_mode<synchronous>, transform_indices = @transform_5, window_bounds = array<i64: 1, 32>}, {pipeline_mode = #tpu.pipeline_mode<synchronous>, transform_indices = @transform_6, window_bounds = array<i64: 1, 10>}, {transform_indices = @transform_7, window_bounds = array<i64: 8, 10>}]} {
    %c0 = arith.constant 0 : index
    %c0_0 = arith.constant 0 : index
    %0 = vector.load %arg1[%c0, %c0_0] : memref<8x32xf32, #tpu.memory_space<vmem>>, vector<8x32xf32>
    %c0_1 = arith.constant 0 : index
    %c0_2 = arith.constant 0 : index
    %1 = vector.load %arg2[%c0_1, %c0_2] : memref<32x32xf32, #tpu.memory_space<vmem>>, vector<32x32xf32>
    %cst = arith.constant dense<0.000000e+00> : vector<8x32xf32>
    %2 = tpu.matmul %0, %1, %cst {dimension_numbers = #tpu.dot_dimension_numbers<[1], [0], [0], [1], [0, 0, 1, 1], [], []>} : vector<8x32xf32>, vector<32x32xf32>, vector<8x32xf32> -> vector<8x32xf32>
    %c0_3 = arith.constant 0 : index
    %c0_4 = arith.constant 0 : index
    %3 = vector.load %arg5[%c0_3, %c0_4] : memref<1x32xf32, #tpu.memory_space<vmem>>, vector<1x32xf32>
    %4 = vector.broadcast %3 : vector<1x32xf32> to vector<8x32xf32>
    %5 = arith.addf %2, %4 : vector<8x32xf32>
    %cst_5 = arith.constant 0.000000e+00 : f32
    %6 = vector.broadcast %cst_5 : f32 to vector<8x32xf32>
    %7 = arith.maximumf %5, %6 : vector<8x32xf32>
    %c0_6 = arith.constant 0 : index
    %c0_7 = arith.constant 0 : index
    %8 = vector.load %arg3[%c0_6, %c0_7] : memref<32x32xf32, #tpu.memory_space<vmem>>, vector<32x32xf32>
    %cst_8 = arith.constant dense<0.000000e+00> : vector<8x32xf32>
    %9 = tpu.matmul %7, %8, %cst_8 {dimension_numbers = #tpu.dot_dimension_numbers<[1], [0], [0], [1], [0, 0, 1, 1], [], []>} : vector<8x32xf32>, vector<32x32xf32>, vector<8x32xf32> -> vector<8x32xf32>
    %c0_9 = arith.constant 0 : index
    %c0_10 = arith.constant 0 : index
    %10 = vector.load %arg6[%c0_9, %c0_10] : memref<1x32xf32, #tpu.memory_space<vmem>>, vector<1x32xf32>
    %11 = vector.broadcast %10 : vector<1x32xf32> to vector<8x32xf32>
    %12 = arith.addf %9, %11 : vector<8x32xf32>
    %cst_11 = arith.constant 0.000000e+00 : f32
    %13 = vector.broadcast %cst_11 : f32 to vector<8x32xf32>
    %14 = arith.maximumf %12, %13 : vector<8x32xf32>
    %c0_12 = arith.constant 0 : index
    %c0_13 = arith.constant 0 : index
    %15 = vector.load %arg4[%c0_12, %c0_13] : memref<32x10xf32, #tpu.memory_space<vmem>>, vector<32x10xf32>
    %cst_14 = arith.constant dense<0.000000e+00> : vector<8x10xf32>
    %16 = tpu.matmul %14, %15, %cst_14 {dimension_numbers = #tpu.dot_dimension_numbers<[1], [0], [0], [1], [0, 0, 1, 1], [], []>} : vector<8x32xf32>, vector<32x10xf32>, vector<8x10xf32> -> vector<8x10xf32>
    %c0_15 = arith.constant 0 : index
    %c0_16 = arith.constant 0 : index
    %17 = vector.load %arg7[%c0_15, %c0_16] : memref<1x10xf32, #tpu.memory_space<vmem>>, vector<1x10xf32>
    %18 = vector.broadcast %17 : vector<1x10xf32> to vector<8x10xf32>
    %19 = arith.addf %16, %18 : vector<8x10xf32>
    %c0_17 = arith.constant 0 : index
    %c0_18 = arith.constant 0 : index
    %20 = vector.load %arg8[%c0_17, %c0_18] : memref<8x10xf32, #tpu.memory_space<vmem>>, vector<8x10xf32>
    tpu.vector_store %arg8[%c0_17, %c0_18], %19 {strides = array<i32>} : memref<8x10xf32, #tpu.memory_space<vmem>>, vector<8x10xf32>,
    return
  }
  func.func @transform_0(%arg0: i32) -> (i32, i32) {
    %c0_i32 = arith.constant 0 : i32
    %c0_i32_0 = arith.constant 0 : i32
    return %arg0, %c0_i32 : i32, i32
  }
  func.func @transform_1(%arg0: i32) -> (i32, i32) {
    %c0_i32 = arith.constant 0 : i32
    %c0_i32_0 = arith.constant 0 : i32
    %c0_i32_1 = arith.constant 0 : i32
    return %c0_i32, %c0_i32_0 : i32, i32
  }
  func.func @transform_2(%arg0: i32) -> (i32, i32) {
    %c0_i32 = arith.constant 0 : i32
    %c0_i32_0 = arith.constant 0 : i32
    %c0_i32_1 = arith.constant 0 : i32
    return %c0_i32, %c0_i32_0 : i32, i32
  }
  func.func @transform_3(%arg0: i32) -> (i32, i32) {
    %c0_i32 = arith.constant 0 : i32
    %c0_i32_0 = arith.constant 0 : i32
    %c0_i32_1 = arith.constant 0 : i32
    return %c0_i32, %c0_i32_0 : i32, i32
  }
  func.func @transform_4(%arg0: i32) -> (i32, i32) {
    %c0_i32 = arith.constant 0 : i32
    %c0_i32_0 = arith.constant 0 : i32
    %c0_i32_1 = arith.constant 0 : i32
    return %c0_i32, %c0_i32_0 : i32, i32
  }
  func.func @transform_5(%arg0: i32) -> (i32, i32) {
    %c0_i32 = arith.constant 0 : i32
    %c0_i32_0 = arith.constant 0 : i32
    %c0_i32_1 = arith.constant 0 : i32
    return %c0_i32, %c0_i32_0 : i32, i32
  }
  func.func @transform_6(%arg0: i32) -> (i32, i32) {
    %c0_i32 = arith.constant 0 : i32
    %c0_i32_0 = arith.constant 0 : i32
    %c0_i32_1 = arith.constant 0 : i32
    return %c0_i32, %c0_i32_0 : i32, i32
  }
  func.func @transform_7(%arg0: i32) -> (i32, i32) {
    %c0_i32 = arith.constant 0 : i32
    %c0_i32_0 = arith.constant 0 : i32
    return %arg0, %c0_i32 : i32, i32
  }
}

</mosaic_0001>

<llo_original>
// kernel: mlp_classifier_forward.1
$region0: #{mlp_classifier_forward.1}
  #allocation0 [shape = 'u32[]', space=smem, size = 0x4, offset = 0x4, fixed_abs, tag = 'smem constant byte address 0x4 - core index']
  #allocation1 [shape = 'u32[72,128]{1,0:T(1,128)}', space=vmem, size = 0x9000, scoped, tag = 'internal scratch']
  %s0 = inlined_call_operand.vmem [shape: f32[8,32], index: 0, kind: input, shape index: {}]
  %s1 = inlined_call_operand.vmem [shape: f32[32,32], index: 1, kind: input, shape index: {}]
  %s2 = inlined_call_operand.hbm [shape: f32[32,32], index: 2, kind: input, shape index: {}]
  %s3 = inlined_call_operand.vmem [shape: f32[32,10], index: 3, kind: input, shape index: {}]
  %s4 = inlined_call_operand.vmem [shape: f32[1,32], index: 4, kind: input, shape index: {}]
  %s5 = inlined_call_operand.vmem [shape: f32[1,32], index: 5, kind: input, shape index: {}]
  %s6 = inlined_call_operand.vmem [shape: f32[1,10], index: 6, kind: input, shape index: {}]
  %s7 = inlined_call_operand.hbm [shape: f32[8,10], index: 7, kind: output, shape index: {}]
  %s8 = sld [smem:[#allocation0]]
  $region42: #{mlp_classifier_forward.1} parent=0
    _
  %s10 = ssub.s32 1, %s8
  %s11 = scalar_select 0, %s10, %s8
  $region1: #{mlp_classifier_forward.1} parent=0
    #allocation2 [shape = 'u8[16384]{0}', space=vmem, size = 0x4000, scoped, tag = 'input window, operand 2, single buffered']
    #allocation3 [shape = 's32[1]{0}', space=sflag, size = 0x4, scoped, tag = 'scoped memory for mlp_classifier_forward.1']
    #allocation4 [shape = 's32[1]{0}', space=sflag, size = 0x4, scoped, tag = 'scoped memory for mlp_classifier_forward.1']
    #allocation5 [shape = 'u8[4096]{0}', space=vmem, size = 0x1000, scoped, tag = 'output window, operand 0, single buffered']
    %12 = vsyncpa [#allocation3], 0
    %13 = vsyncpa [#allocation4], 0
    // Predicated region
    $region2: #{mlp_classifier_forward.1} parent=1 // pred_check
      _
    $region3: #{mlp_classifier_forward.1} parent=1 // pred_check_branch
      %15 = sbr.rel (0) target = $region5
    $region4: #{mlp_classifier_forward.1} parent=1 // pred_region
      _
    $region5: #{mlp_classifier_forward.1} parent=1 // pred_fallthru
      _
    // Predicated region
    $region6: #{mlp_classifier_forward.1} parent=1 // pred_check
      _
    $region7: #{mlp_classifier_forward.1} parent=1 // pred_check_branch
      %17 = sbr.rel (0) target = $region9
    $region8: #{mlp_classifier_forward.1} parent=1 // pred_region
      _
    $region9: #{mlp_classifier_forward.1} parent=1 // pred_fallthru
      _
    // Predicated region
    $region10: #{mlp_classifier_forward.1} parent=1 // pred_check
      _
    $region11: #{mlp_classifier_forward.1} parent=1 // pred_check_branch
      %19 = sbr.rel (0) target = $region13
    $region12: #{mlp_classifier_forward.1} parent=1 // pred_region
      %21 = vsyncadd [#allocation3], 0
      %s22 = sshll.u32 %s2, 4
      %s23 = int_to_ptr.hbm [resolvable:$true] %s22
      %s24 = sshll.u32 [#allocation2], 4
      %s25 = int_to_ptr.vmem [resolvable:$true] %s24
      %30 = dma.hbm_to_vmem [thread:$0]  %s23, 512, %s25, [#allocation3], 128, 128, 8
    $region13: #{mlp_classifier_forward.1} parent=1 // pred_fallthru
      _
    // Predicated region
    $region14: #{mlp_classifier_forward.1} parent=1 // pred_check
      _
    $region15: #{mlp_classifier_forward.1} parent=1 // pred_check_branch
      %32 = sbr.rel (0) target = $region17
    $region16: #{mlp_classifier_forward.1} parent=1 // pred_region
      _
    $region17: #{mlp_classifier_forward.1} parent=1 // pred_fallthru
      _
    // Predicated region
    $region18: #{mlp_classifier_forward.1} parent=1 // pred_check
      _
    $region19: #{mlp_classifier_forward.1} parent=1 // pred_check_branch
      %34 = sbr.rel (0) target = $region21
    $region20: #{mlp_classifier_forward.1} parent=1 // pred_region
      _
    $region21: #{mlp_classifier_forward.1} parent=1 // pred_fallthru
      _
    // Predicated region
    $region22: #{mlp_classifier_forward.1} parent=1 // pred_check
      _
    $region23: #{mlp_classifier_forward.1} parent=1 // pred_check_branch
      %36 = sbr.rel (0) target = $region25
    $region24: #{mlp_classifier_forward.1} parent=1 // pred_region
      _
    $region25: #{mlp_classifier_forward.1} parent=1 // pred_fallthru
      _
    // Predicated region
    $region26: #{mlp_classifier_forward.1} parent=1 // pred_check
      _
    $region27: #{mlp_classifier_forward.1} parent=1 // pred_check_branch
      %38 = sbr.rel (0) target = $region29
    $region28: #{mlp_classifier_forward.1} parent=1 // pred_region
      _
    $region29: #{mlp_classifier_forward.1} parent=1 // pred_fallthru
      _
    // Predicated region
    $region30: #{mlp_classifier_forward.1} parent=1 // pred_check
      _
    $region31: #{mlp_classifier_forward.1} parent=1 // pred_check_branch
      %40 = sbr.rel (0) target = $region33
    $region32: #{mlp_classifier_forward.1} parent=1 // pred_region
      %42 = dma.done [#allocation3], 512
    $region33: #{mlp_classifier_forward.1} parent=1 // pred_fallthru
      _
    %v43 = vld [vmem:[%s0] sm:$0xff]
    %v44 = vld [vmem:[%s1] sm:$0xff]
    %v45 = vld [vmem:[%s1 + $0x8] sm:$0xff]
    %v46 = vld [vmem:[%s1 + $0x10] sm:$0xff]
    %v47 = vld [vmem:[%s1 + $0x18] sm:$0xff]
    %v48 = vld [vmem:[%s4] sm:$0x1]
    %v50 = vperm.slane %v48, 0
    %vm52 = vcmask 261120
    %v54 = vsel %vm52, %v43, 0
    %56 = vmatpush.msra.mxu0 0.0
    %57 = vmatpush.msra.mxu0 0.0
    %58 = vmatpush.msra.mxu0 0.0
    %59 = vmatpush.msra.mxu0 0.0
    %60 = vmatpush.msra.mxu0 0.0
    %61 = vmatpush.msra.mxu0 0.0
    %62 = vmatpush.msra.mxu0 0.0
    %63 = vmatpush.msra.mxu0 0.0
    %64 = vmatpush.msra.mxu0 0.0
    %65 = vmatpush.msra.mxu0 0.0
    %66 = vmatpush.msra.mxu0 0.0
    %67 = vmatpush.msra.mxu0 0.0
    %68 = vmatpush.msra.mxu0 %v47
    %69 = vmatpush.msra.mxu0 %v46
    %70 = vmatpush.msra.mxu0 %v45
    %71 = vmatpush.msra.mxu0 %v44
    %72 = vmatmul.f32.gmra.mxu0 %v54
    %v73 = vpop.f32.mrf.mxu0
    %v74 = vadd.f32 %v50, %v73
    %75 = vdwg.mxu0
    %v76 = vmax.f32 %v74, 0.0
    %v77 = vld [vmem:[#allocation2] sm:$0xff]
    %v78 = vld [vmem:[#allocation2 + $0x8] sm:$0xff]
    %v79 = vld [vmem:[#allocation2 + $0x10] sm:$0xff]
    %v80 = vld [vmem:[#allocation2 + $0x18] sm:$0xff]
    %v81 = vld [vmem:[%s5] sm:$0x1]
    %v83 = vperm.slane %v81, 0
    %v86 = vsel %vm52, %v76, 0
    %88 = vmatpush.msra.mxu0 0.0
    %89 = vmatpush.msra.mxu0 0.0
    %90 = vmatpush.msra.mxu0 0.0
    %91 = vmatpush.msra.mxu0 0.0
    %92 = vmatpush.msra.mxu0 0.0
    %93 = vmatpush.msra.mxu0 0.0
    %94 = vmatpush.msra.mxu0 0.0
    %95 = vmatpush.msra.mxu0 0.0
    %96 = vmatpush.msra.mxu0 0.0
    %97 = vmatpush.msra.mxu0 0.0
    %98 = vmatpush.msra.mxu0 0.0
    %99 = vmatpush.msra.mxu0 0.0
    %100 = vmatpush.msra.mxu0 %v80
    %101 = vmatpush.msra.mxu0 %v79
    %102 = vmatpush.msra.mxu0 %v78
    %103 = vmatpush.msra.mxu0 %v77
    %104 = vmatmul.f32.gmra.mxu0 %v86
    %v105 = vpop.f32.mrf.mxu0
    %v106 = vadd.f32 %v83, %v105
    %107 = vdwg.mxu0
    %v108 = vmax.f32 %v106, 0.0
    %v109 = vld [vmem:[%s3] sm:$0xff]
    %v110 = vld [vmem:[%s3 + $0x8] sm:$0xff]
    %v111 = vld [vmem:[%s3 + $0x10] sm:$0xff]
    %v112 = vld [vmem:[%s3 + $0x18] sm:$0xff]
    %v113 = vld [vmem:[%s6] sm:$0x1]
    %v115 = vperm.slane %v113, 0
    %v118 = vsel %vm52, %v108, 0
    %120 = vmatpush.msra.mxu0 0.0
    %121 = vmatpush.msra.mxu0 0.0
    %122 = vmatpush.msra.mxu0 0.0
    %123 = vmatpush.msra.mxu0 0.0
    %124 = vmatpush.msra.mxu0 0.0
    %125 = vmatpush.msra.mxu0 0.0
    %126 = vmatpush.msra.mxu0 0.0
    %127 = vmatpush.msra.mxu0 0.0
    %128 = vmatpush.msra.mxu0 0.0
    %129 = vmatpush.msra.mxu0 0.0
    %130 = vmatpush.msra.mxu0 0.0
    %131 = vmatpush.msra.mxu0 0.0
    %132 = vmatpush.msra.mxu0 %v112
    %133 = vmatpush.msra.mxu0 %v111
    %134 = vmatpush.msra.mxu0 %v110
    %135 = vmatpush.msra.mxu0 %v109
    %136 = vmatmul.f32.gmra.mxu0 %v118
    %v137 = vpop.f32.mrf.mxu0
    %v138 = vadd.f32 %v115, %v137
    %139 = vdwg.mxu0
    %vm140 = vcmask 80896
    %141 = vst.msk [vmem:[#allocation5] sm:$0xff] %vm140, %v138
    // Predicated region
    $region34: #{mlp_classifier_forward.1} parent=1 // pred_check
      _
    $region35: #{mlp_classifier_forward.1} parent=1 // pred_check_branch
      %143 = sbr.rel (0) target = $region37
    $region36: #{mlp_classifier_forward.1} parent=1 // pred_region
      %145 = vsyncadd [#allocation4], 0
      %s147 = sshll.u32 [#allocation5], 4
      %s148 = int_to_ptr.vmem [resolvable:$true] %s147
      %s149 = sshll.u32 %s7, 4
      %s150 = int_to_ptr.hbm [resolvable:$true] %s149
      %152 = dma.vmem_to_hbm [thread:$0]  %s148, 128, %s150, [#allocation4]
    $region37: #{mlp_classifier_forward.1} parent=1 // pred_fallthru
      _
    // Predicated region
    $region38: #{mlp_classifier_forward.1} parent=1 // pred_check
      _
    $region39: #{mlp_classifier_forward.1} parent=1 // pred_check_branch
      %154 = sbr.rel (0) target = $region41
    $region40: #{mlp_classifier_forward.1} parent=1 // pred_region
      %156 = dma.done [#allocation4], 128
    $region41: #{mlp_classifier_forward.1} parent=1 // pred_fallthru
      _
    %157 = vsyncpa [#allocation3], 1
    %158 = vsyncpa [#allocation4], 1

</llo_original>
